<compile_context>
chip_gen: v7x
topology: tpu7x:2x2x1
jax: 0.10.0
libtpu: 0.0.40
codegen_flags: <defaults>
</compile_context>

<pallas_src>
import functools

import jax
import jax.numpy as jnp
import numpy as np
from jax import lax
from jax.experimental import pallas as pl
from jax.experimental.pallas import tpu as pltpu


# ----------------------------- kernels -------------------------------------


def _encoder_kernel(x_ref, w_ref, b_ref, code_ref, min_ref, max_ref, *,
                    p_total, tile_p, mask_last):
    """x_ref: (1, Cin, TP); w_ref: (Cs, Cin); b_ref: (Cs, 1).
    Writes code (1, Cs, TP) and this tile's min/max broadcast to (1,1,8,128)."""
    code = jnp.dot(w_ref[...], x_ref[0],
                   preferred_element_type=jnp.float32) + b_ref[...]
    code_ref[0] = code

    if mask_last:
        # Last pixel tile may be padded; keep padding out of the global min/max.
        col = pl.program_id(1) * tile_p + lax.broadcasted_iota(
            jnp.int32, code.shape, 1)
        valid = col < p_total
        tmin = jnp.min(jnp.where(valid, code, jnp.inf))
        tmax = jnp.max(jnp.where(valid, code, -jnp.inf))
    else:
        tmin = jnp.min(code)
        tmax = jnp.max(code)

    min_ref[...] = jnp.full(min_ref.shape, tmin, jnp.float32)
    max_ref[...] = jnp.full(max_ref.shape, tmax, jnp.float32)


def _decoder_quant_kernel(stats_ref, code_ref, w_ref, b_ref, out_ref):
    """stats_ref (SMEM f32[3]) = [cmin, scale=levels/span, inv_scale=span/levels]."""
    cmin = stats_ref[0]
    scale = stats_ref[1]
    inv_scale = stats_ref[2]
    code = code_ref[0]                               # (Cs, TP)
    q = jnp.round((code - cmin) * scale - 0.5)       # quantize
    dq = q * inv_scale + cmin                        # dequantize
    out_ref[0] = jnp.dot(w_ref[...], dq,
                         preferred_element_type=jnp.float32) + b_ref[...]


def _conv1x1_kernel(x_ref, w_ref, b_ref, out_ref):
    out_ref[0] = jnp.dot(w_ref[...], x_ref[0],
                         preferred_element_type=jnp.float32) + b_ref[...]


# ----------------------------- wrapper --------------------------------------


def _pick_tile(p, c_a, c_b, *, max_tile=8192, vmem_budget=12 * 1024 * 1024):
    """Pixels per tile: as large as possible (lane-dense, low per-step overhead)
    while double-buffered in+out blocks stay well under scoped VMEM."""
    bytes_per_col = 2 * 4 * (c_a + c_b)          # double-buffered f32 in + out
    cap = (vmem_budget // bytes_per_col) // 128 * 128
    cap = max(128, min(max_tile, cap))
    if p <= cap:
        return p, 1                              # single full-width tile (legal)
    return cap, -(-p // cap)


@functools.partial(jax.jit, static_argnums=(2,))
def autoencoder_forward(x, params, qbit):
    """x: NCHW float32.  params: (w_enc (Cin,Cs), b_enc (1,Cs),
    w_dec (Cs,Cin), b_dec (1,Cin)).  qbit: static int or None."""
    w_enc, b_enc, w_dec, b_dec = params
    n, c_in, hh, ww = x.shape
    c_s = w_enc.shape[1]
    p = hh * ww

    # Free reshape: NCHW -> (N, Cin, H*W).  Pixels land on the lane axis.
    x3 = x.reshape(n, c_in, p).astype(jnp.float32)

    # Weights in channels-on-sublane (transposed) form; tiny, negligible cost.
    w_enc_t = w_enc.T.astype(jnp.float32)                 # (Cs, Cin)
    b_enc_t = b_enc.reshape(c_s, 1).astype(jnp.float32)   # (Cs, 1)
    w_dec_t = w_dec.T.astype(jnp.float32)                 # (Cin, Cs)
    b_dec_t = b_dec.reshape(c_in, 1).astype(jnp.float32)  # (Cin, 1)

    cparams = pltpu.CompilerParams(
        dimension_semantics=("parallel", "parallel"),
        vmem_limit_bytes=32 * 1024 * 1024)

    if qbit is None:
        # Fold both 1x1 convs into one matmul: out = W_fold^T @ x + b_fold^T.
        w_fold_t = w_dec_t @ w_enc_t                      # (Cin, Cin)
        b_fold_t = w_dec_t @ b_enc_t + b_dec_t            # (Cin, 1)
        tile_p, num_tiles = _pick_tile(p, c_in, c_in)
        out3 = pl.pallas_call(
            _conv1x1_kernel,
            out_shape=jax.ShapeDtypeStruct((n, c_in, p), jnp.float32),
            grid_spec=pltpu.PrefetchScalarGridSpec(
                num_scalar_prefetch=0,
                grid=(n, num_tiles),
                in_specs=[
                    pl.BlockSpec((1, c_in, tile_p), lambda b, t: (b, 0, t)),
                    pl.BlockSpec((c_in, c_in), lambda b, t: (0, 0)),
                    pl.BlockSpec((c_in, 1), lambda b, t: (0, 0)),
                ],
                out_specs=pl.BlockSpec((1, c_in, tile_p),
                                       lambda b, t: (b, 0, t)),
            ),
            compiler_params=cparams,
        )(x3, w_fold_t, b_fold_t)
        return out3.reshape(n, c_in, hh, ww)

    # ----------------------------- qbit path --------------------------------
    tile_p, num_tiles = _pick_tile(p, c_in, c_s)
    mask_last = (p % tile_p) != 0

    code, mins, maxs = pl.pallas_call(
        functools.partial(_encoder_kernel, p_total=p, tile_p=tile_p,
                          mask_last=mask_last),
        out_shape=(
            jax.ShapeDtypeStruct((n, c_s, p), jnp.float32),
            jax.ShapeDtypeStruct((n, num_tiles, 8, 128), jnp.float32),
            jax.ShapeDtypeStruct((n, num_tiles, 8, 128), jnp.float32),
        ),
        grid_spec=pltpu.PrefetchScalarGridSpec(
            num_scalar_prefetch=0,
            grid=(n, num_tiles),
            in_specs=[
                pl.BlockSpec((1, c_in, tile_p), lambda b, t: (b, 0, t)),
                pl.BlockSpec((c_s, c_in), lambda b, t: (0, 0)),
                pl.BlockSpec((c_s, 1), lambda b, t: (0, 0)),
            ],
            out_specs=(
                pl.BlockSpec((1, c_s, tile_p), lambda b, t: (b, 0, t)),
                pl.BlockSpec((1, 1, 8, 128), lambda b, t: (b, t, 0, 0)),
                pl.BlockSpec((1, 1, 8, 128), lambda b, t: (b, t, 0, 0)),
            ),
        ),
        compiler_params=cparams,
    )(x3, w_enc_t, b_enc_t)

    # Tiny global reduction over the per-tile partials (keeps the encoder grid
    # fully parallel).  Min/max are order-independent, so this is exact.
    cmin = jnp.min(mins)
    cmax = jnp.max(maxs)
    levels = jnp.float32(2.0 ** qbit - 1.0)
    span = cmax - cmin
    stats = jnp.stack([cmin, levels / span, span / levels]).astype(jnp.float32)

    out3 = pl.pallas_call(
        _decoder_quant_kernel,
        out_shape=jax.ShapeDtypeStruct((n, c_in, p), jnp.float32),
        grid_spec=pltpu.PrefetchScalarGridSpec(
            num_scalar_prefetch=0,
            grid=(n, num_tiles),
            in_specs=[
                pl.BlockSpec(memory_space=pltpu.MemorySpace.SMEM),   # stats
                pl.BlockSpec((1, c_s, tile_p), lambda b, t: (b, 0, t)),
                pl.BlockSpec((c_in, c_s), lambda b, t: (0, 0)),
                pl.BlockSpec((c_in, 1), lambda b, t: (0, 0)),
            ],
            out_specs=pl.BlockSpec((1, c_in, tile_p), lambda b, t: (b, 0, t)),
        ),
        compiler_params=cparams,
    )(stats, code, w_dec_t, b_dec_t)

    return out3.reshape(n, c_in, hh, ww)


# ------------------------- reference & params --------------------------------


def reference_forward(x, params, qbit):
    """Pure-JAX reference mirroring the PyTorch module exactly."""
    w_enc, b_enc, w_dec, b_dec = params
    n, c, h, w = x.shape
    xf = jnp.transpose(x, (0, 2, 3, 1)).reshape(-1, c)
    code = xf @ w_enc + b_enc
    if qbit is not None:
        mn, mx = code.min(), code.max()
        q = jnp.round((2 ** qbit - 1) * (code - mn) / (mx - mn) - 0.5)
        code = q * (mx - mn) / (2 ** qbit - 1) + mn
    out = code @ w_dec + b_dec
    return out.reshape(n, h, w, c).transpose(0, 3, 1, 2)


def init_params(key, in_channels, shrink_factor):
    """Deterministic synthetic init (shapes match nn.Conv2d(.., (1,1)))."""
    shrinked = max(int(in_channels / shrink_factor), 1)
    k1, k2, k3, k4 = jax.random.split(key, 4)
    # torch conv weight is (Cout, Cin, 1, 1); we store the matmul form (Cin, Cout).
    w_enc = 0.3 * jax.random.normal(k1, (in_channels, shrinked), jnp.float32)
    b_enc = 0.1 * jax.random.normal(k2, (1, shrinked), jnp.float32)
    w_dec = 0.3 * jax.random.normal(k3, (shrinked, in_channels), jnp.float32)
    b_dec = 0.1 * jax.random.normal(k4, (1, in_channels), jnp.float32)
    return w_enc, b_enc, w_dec, b_dec


if __name__ == "__main__":
    key = jax.random.PRNGKey(0)
    kx, kp = jax.random.split(key)

    in_channels, shrink_factor = 8, 4
    n, h, w = 2, 16, 16
    qbit = 8

    x = jax.random.normal(kx, (n, in_channels, h, w), jnp.float32)
    params = init_params(kp, in_channels, shrink_factor)
    w_enc, b_enc, w_dec, b_dec = params

    # ---- quantized path ----
    out_q = jax.block_until_ready(autoencoder_forward(x, params, qbit))
    ref_q = reference_forward(x, params, qbit)
    assert out_q.shape == x.shape
    # Quantization can flip one level when a pre-round value sits within a few
    # ULPs of a .5 boundary (MXU vs XLA accumulation order); bound the output
    # error by one quantization step propagated through the decoder weights.
    code_ref = (jnp.transpose(x, (0, 2, 3, 1)).reshape(-1, in_channels)
                @ w_enc + b_enc)
    qstep = float((code_ref.max() - code_ref.min()) / (2 ** qbit - 1))
    atol_q = qstep * float(jnp.abs(w_dec).sum(axis=0).max()) + 1e-4
    np.testing.assert_allclose(np.asarray(out_q), np.asarray(ref_q),
                               rtol=1e-3, atol=atol_q)
    err = np.abs(np.asarray(out_q) - np.asarray(ref_q))
    assert float(np.mean(err <= 1e-3)) >= 0.97, "too many large mismatches"

    # ---- no-quantization path (folded single matmul): tight tolerance ----
    out_p = jax.block_until_ready(autoencoder_forward(x, params, None))
    ref_p = reference_forward(x, params, None)
    np.testing.assert_allclose(np.asarray(out_p), np.asarray(ref_p),
                               rtol=1e-4, atol=1e-4)

    print("KERNEL_OK")
</pallas_src>

<mosaic_0001>
module attributes {stable_mosaic.version = 11 : i64} {
  func.func @_encoder_kernel(%arg0: i32, %arg1: i32, %arg2: memref<1x8x256xf32, #tpu.memory_space<vmem>>, %arg3: memref<2x8xf32, #tpu.memory_space<vmem>>, %arg4: memref<2x1xf32, #tpu.memory_space<vmem>>, %arg5: memref<1x2x256xf32, #tpu.memory_space<vmem>>, %arg6: memref<1x1x8x128xf32, #tpu.memory_space<vmem>>, %arg7: memref<1x1x8x128xf32, #tpu.memory_space<vmem>>) attributes {dimension_semantics = [#tpu.dimension_semantics<parallel>, #tpu.dimension_semantics<parallel>], iteration_bounds = array<i64: 2, 1>, scalar_prefetch = 0 : i64, scratch_operands = 0 : i64, tpu.core_type = #tpu.core_type<tc>, window_params = [{transform_indices = @transform_0, window_bounds = array<i64: 1, 8, 256>}, {pipeline_mode = #tpu.pipeline_mode<synchronous>, transform_indices = @transform_1, window_bounds = array<i64: 2, 8>}, {pipeline_mode = #tpu.pipeline_mode<synchronous>, transform_indices = @transform_2, window_bounds = array<i64: 2, 1>}, {transform_indices = @transform_3, window_bounds = array<i64: 1, 2, 256>}, {transform_indices = @transform_4, window_bounds = array<i64: 1, 1, 8, 128>}, {transform_indices = @transform_5, window_bounds = array<i64: 1, 1, 8, 128>}]} {
    %c0 = arith.constant 0 : index
    %c0_0 = arith.constant 0 : index
    %0 = vector.load %arg3[%c0, %c0_0] : memref<2x8xf32, #tpu.memory_space<vmem>>, vector<2x8xf32>
    %c0_1 = arith.constant 0 : index
    %c0_2 = arith.constant 0 : index
    %c0_3 = arith.constant 0 : index
    %1 = vector.load %arg2[%c0_1, %c0_2, %c0_3] : memref<1x8x256xf32, #tpu.memory_space<vmem>>, vector<1x8x256xf32>
    %2 = vector.shape_cast %1 : vector<1x8x256xf32> to vector<8x256xf32>
    %cst = arith.constant dense<0.000000e+00> : vector<2x256xf32>
    %3 = tpu.matmul %0, %2, %cst {dimension_numbers = #tpu.dot_dimension_numbers<[1], [0], [0], [1], [0, 0, 1, 1], [], []>} : vector<2x8xf32>, vector<8x256xf32>, vector<2x256xf32> -> vector<2x256xf32>
    %c0_4 = arith.constant 0 : index
    %c0_5 = arith.constant 0 : index
    %4 = vector.load %arg4[%c0_4, %c0_5] : memref<2x1xf32, #tpu.memory_space<vmem>>, vector<2x1xf32>
    %5 = vector.broadcast %4 : vector<2x1xf32> to vector<2x256xf32>
    %6 = arith.addf %3, %5 : vector<2x256xf32>
    %c0_6 = arith.constant 0 : index
    %c0_7 = arith.constant 0 : index
    %c0_8 = arith.constant 0 : index
    %7 = vector.load %arg5[%c0_6, %c0_7, %c0_8] : memref<1x2x256xf32, #tpu.memory_space<vmem>>, vector<1x2x256xf32>
    %8 = vector.shape_cast %7 : vector<1x2x256xf32> to vector<2x256xf32>
    %9 = vector.shape_cast %6 : vector<2x256xf32> to vector<1x2x256xf32>
    tpu.vector_store %arg5[%c0_6, %c0_7, %c0_8], %9 {strides = array<i32>} : memref<1x2x256xf32, #tpu.memory_space<vmem>>, vector<1x2x256xf32>,
    %10 = vector.shape_cast %6 : vector<2x256xf32> to vector<1x2x256xf32>
    %cst_9 = arith.constant dense<0x7F800000> : vector<1xf32>
    %11 = vector.multi_reduction <minimumf>, %10, %cst_9 [1, 2] : vector<1x2x256xf32> to vector<1xf32>
    %12 = vector.shape_cast %11 : vector<1xf32> to vector<1x1x1xf32>
    %13 = vector.extract %12[0, 0, 0] : f32 from vector<1x1x1xf32>
    %14 = vector.shape_cast %6 : vector<2x256xf32> to vector<1x2x256xf32>
    %cst_10 = arith.constant dense<0xFF800000> : vector<1xf32>
    %15 = vector.multi_reduction <maximumf>, %14, %cst_10 [1, 2] : vector<1x2x256xf32> to vector<1xf32>
    %16 = vector.shape_cast %15 : vector<1xf32> to vector<1x1x1xf32>
    %17 = vector.extract %16[0, 0, 0] : f32 from vector<1x1x1xf32>
    %18 = vector.broadcast %13 : f32 to vector<1x1x8x128xf32>
    %c0_11 = arith.constant 0 : index
    %c0_12 = arith.constant 0 : index
    %c0_13 = arith.constant 0 : index
    %c0_14 = arith.constant 0 : index
    %19 = vector.load %arg6[%c0_11, %c0_12, %c0_13, %c0_14] : memref<1x1x8x128xf32, #tpu.memory_space<vmem>>, vector<1x1x8x128xf32>
    tpu.vector_store %arg6[%c0_11, %c0_12, %c0_13, %c0_14], %18 {strides = array<i32>} : memref<1x1x8x128xf32, #tpu.memory_space<vmem>>, vector<1x1x8x128xf32>,
    %20 = vector.broadcast %17 : f32 to vector<1x1x8x128xf32>
    %c0_15 = arith.constant 0 : index
    %c0_16 = arith.constant 0 : index
    %c0_17 = arith.constant 0 : index
    %c0_18 = arith.constant 0 : index
    %21 = vector.load %arg7[%c0_15, %c0_16, %c0_17, %c0_18] : memref<1x1x8x128xf32, #tpu.memory_space<vmem>>, vector<1x1x8x128xf32>
    tpu.vector_store %arg7[%c0_15, %c0_16, %c0_17, %c0_18], %20 {strides = array<i32>} : memref<1x1x8x128xf32, #tpu.memory_space<vmem>>, vector<1x1x8x128xf32>,
    return
  }
  func.func @transform_0(%arg0: i32, %arg1: i32) -> (i32, i32, i32) {
    %c0_i32 = arith.constant 0 : i32
    %c0_i32_0 = arith.constant 0 : i32
    return %arg0, %c0_i32, %arg1 : i32, i32, i32
  }
  func.func @transform_1(%arg0: i32, %arg1: i32) -> (i32, i32) {
    %c0_i32 = arith.constant 0 : i32
    %c0_i32_0 = arith.constant 0 : i32
    %c0_i32_1 = arith.constant 0 : i32
    return %c0_i32, %c0_i32_0 : i32, i32
  }
  func.func @transform_2(%arg0: i32, %arg1: i32) -> (i32, i32) {
    %c0_i32 = arith.constant 0 : i32
    %c0_i32_0 = arith.constant 0 : i32
    %c0_i32_1 = arith.constant 0 : i32
    return %c0_i32, %c0_i32_0 : i32, i32
  }
  func.func @transform_3(%arg0: i32, %arg1: i32) -> (i32, i32, i32) {
    %c0_i32 = arith.constant 0 : i32
    %c0_i32_0 = arith.constant 0 : i32
    return %arg0, %c0_i32, %arg1 : i32, i32, i32
  }
  func.func @transform_4(%arg0: i32, %arg1: i32) -> (i32, i32, i32, i32) {
    %c0_i32 = arith.constant 0 : i32
    %c0_i32_0 = arith.constant 0 : i32
    %c0_i32_1 = arith.constant 0 : i32
    return %arg0, %arg1, %c0_i32, %c0_i32_0 : i32, i32, i32, i32
  }
  func.func @transform_5(%arg0: i32, %arg1: i32) -> (i32, i32, i32, i32) {
    %c0_i32 = arith.constant 0 : i32
    %c0_i32_0 = arith.constant 0 : i32
    %c0_i32_1 = arith.constant 0 : i32
    return %arg0, %arg1, %c0_i32, %c0_i32_0 : i32, i32, i32, i32
  }
}

module attributes {stable_mosaic.version = 11 : i64} {
  func.func @_decoder_quant_kernel(%arg0: i32, %arg1: i32, %arg2: memref<3xf32, #tpu.memory_space<smem>>, %arg3: memref<1x2x256xf32, #tpu.memory_space<vmem>>, %arg4: memref<8x2xf32, #tpu.memory_space<vmem>>, %arg5: memref<8x1xf32, #tpu.memory_space<vmem>>, %arg6: memref<1x8x256xf32, #tpu.memory_space<vmem>>) attributes {dimension_semantics = [#tpu.dimension_semantics<parallel>, #tpu.dimension_semantics<parallel>], iteration_bounds = array<i64: 2, 1>, scalar_prefetch = 0 : i64, scratch_operands = 0 : i64, tpu.core_type = #tpu.core_type<tc>, window_params = [{transform_indices = @transform_0, window_bounds = array<i64: 3>}, {transform_indices = @transform_1, window_bounds = array<i64: 1, 2, 256>}, {pipeline_mode = #tpu.pipeline_mode<synchronous>, transform_indices = @transform_2, window_bounds = array<i64: 8, 2>}, {pipeline_mode = #tpu.pipeline_mode<synchronous>, transform_indices = @transform_3, window_bounds = array<i64: 8, 1>}, {transform_indices = @transform_4, window_bounds = array<i64: 1, 8, 256>}]} {
    %c0 = arith.constant 0 : index
    %0 = memref.load %arg2[%c0] : memref<3xf32, #tpu.memory_space<smem>>
    %c1 = arith.constant 1 : index
    %1 = memref.load %arg2[%c1] : memref<3xf32, #tpu.memory_space<smem>>
    %c2 = arith.constant 2 : index
    %2 = memref.load %arg2[%c2] : memref<3xf32, #tpu.memory_space<smem>>
    %c0_0 = arith.constant 0 : index
    %c0_1 = arith.constant 0 : index
    %c0_2 = arith.constant 0 : index
    %3 = vector.load %arg3[%c0_0, %c0_1, %c0_2] : memref<1x2x256xf32, #tpu.memory_space<vmem>>, vector<1x2x256xf32>
    %4 = vector.shape_cast %3 : vector<1x2x256xf32> to vector<2x256xf32>
    %5 = vector.broadcast %0 : f32 to vector<2x256xf32>
    %6 = arith.subf %4, %5 : vector<2x256xf32>
    %7 = vector.broadcast %1 : f32 to vector<2x256xf32>
    %8 = arith.mulf %6, %7 : vector<2x256xf32>
    %cst = arith.constant 5.000000e-01 : f32
    %9 = vector.broadcast %cst : f32 to vector<2x256xf32>
    %10 = arith.subf %8, %9 : vector<2x256xf32>
    %11 = math.roundeven %10 : vector<2x256xf32>
    %12 = vector.broadcast %2 : f32 to vector<2x256xf32>
    %13 = arith.mulf %11, %12 : vector<2x256xf32>
    %14 = vector.broadcast %0 : f32 to vector<2x256xf32>
    %15 = arith.addf %13, %14 : vector<2x256xf32>
    %c0_3 = arith.constant 0 : index
    %c0_4 = arith.constant 0 : index
    %16 = vector.load %arg4[%c0_3, %c0_4] : memref<8x2xf32, #tpu.memory_space<vmem>>, vector<8x2xf32>
    %cst_5 = arith.constant dense<0.000000e+00> : vector<8x256xf32>
    %17 = tpu.matmul %16, %15, %cst_5 {dimension_numbers = #tpu.dot_dimension_numbers<[1], [0], [0], [1], [0, 0, 1, 1], [], []>} : vector<8x2xf32>, vector<2x256xf32>, vector<8x256xf32> -> vector<8x256xf32>
    %c0_6 = arith.constant 0 : index
    %c0_7 = arith.constant 0 : index
    %18 = vector.load %arg5[%c0_6, %c0_7] : memref<8x1xf32, #tpu.memory_space<vmem>>, vector<8x1xf32>
    %19 = vector.broadcast %18 : vector<8x1xf32> to vector<8x256xf32>
    %20 = arith.addf %17, %19 : vector<8x256xf32>
    %c0_8 = arith.constant 0 : index
    %c0_9 = arith.constant 0 : index
    %c0_10 = arith.constant 0 : index
    %21 = vector.load %arg6[%c0_8, %c0_9, %c0_10] : memref<1x8x256xf32, #tpu.memory_space<vmem>>, vector<1x8x256xf32>
    %22 = vector.shape_cast %21 : vector<1x8x256xf32> to vector<8x256xf32>
    %23 = vector.shape_cast %20 : vector<8x256xf32> to vector<1x8x256xf32>
    tpu.vector_store %arg6[%c0_8, %c0_9, %c0_10], %23 {strides = array<i32>} : memref<1x8x256xf32, #tpu.memory_space<vmem>>, vector<1x8x256xf32>,
    return
  }
  func.func @transform_0(%arg0: i32, %arg1: i32) -> i32 {
    %c0_i32 = arith.constant 0 : i32
    %c0_i32_0 = arith.constant 0 : i32
    return %c0_i32 : i32
  }
  func.func @transform_1(%arg0: i32, %arg1: i32) -> (i32, i32, i32) {
    %c0_i32 = arith.constant 0 : i32
    %c0_i32_0 = arith.constant 0 : i32
    return %arg0, %c0_i32, %arg1 : i32, i32, i32
  }
  func.func @transform_2(%arg0: i32, %arg1: i32) -> (i32, i32) {
    %c0_i32 = arith.constant 0 : i32
    %c0_i32_0 = arith.constant 0 : i32
    %c0_i32_1 = arith.constant 0 : i32
    return %c0_i32, %c0_i32_0 : i32, i32
  }
  func.func @transform_3(%arg0: i32, %arg1: i32) -> (i32, i32) {
    %c0_i32 = arith.constant 0 : i32
    %c0_i32_0 = arith.constant 0 : i32
    %c0_i32_1 = arith.constant 0 : i32
    return %c0_i32, %c0_i32_0 : i32, i32
  }
  func.func @transform_4(%arg0: i32, %arg1: i32) -> (i32, i32, i32) {
    %c0_i32 = arith.constant 0 : i32
    %c0_i32_0 = arith.constant 0 : i32
    return %arg0, %c0_i32, %arg1 : i32, i32, i32
  }
}

</mosaic_0001>

<llo_original>
// kernel: autoencoder_forward.3
$region0: #{autoencoder_forward.3}
  #allocation0 [shape = 'u32[]', space=smem, size = 0x4, offset = 0x4, fixed_abs, tag = 'smem constant byte address 0x4 - core index']
  #allocation1 [shape = 'u32[144,128]{1,0:T(1,128)}', space=vmem, size = 0x12000, scoped, tag = 'internal scratch']
  %s0 = inlined_call_operand.vmem [shape: f32[3], index: 0, kind: input, shape index: {}]
  %s1 = inlined_call_operand.vmem [shape: f32[2,2,256], index: 1, kind: input, shape index: {}]
  %s2 = inlined_call_operand.vmem [shape: f32[8,2], index: 2, kind: input, shape index: {}]
  %s3 = inlined_call_operand.vmem [shape: f32[8,1], index: 3, kind: input, shape index: {}]
  %s4 = inlined_call_operand.vmem [shape: f32[2,8,256], index: 4, kind: output, shape index: {}]
  %s5 = sld [smem:[#allocation0]]
  $region53: #{autoencoder_forward.3} parent=0
    _
  %s7 = ssub.s32 1, %s5
  %s8 = scalar_select 0, %s7, %s5
  $region1: #{autoencoder_forward.3} parent=0
    #allocation2 [shape = 'u8[512]{0}', space=smem, size = 0x200, scoped, tag = 'input window, operand 0, single buffered']
    #allocation3 [shape = 's32[2]{0}', space=sflag, size = 0x8, scoped, tag = 'scoped memory for autoencoder_forward.3']
    %9 = vsyncpa [#allocation3], 0
    loop: start=0, step=1, limit=4
    $region2: #{autoencoder_forward.3} parent=1 // loop_pre_header
      _
    $region3: #{autoencoder_forward.3} parent=1 // loop_header
      %s11 = sphi 0, %s15
      %p12 = scmp.ge.s32.totalorder %s11, 4
      %s18 = sphi 0, %s30
      %s19 = sphi 0, %s26
      %s20 = sphi 0, %s18
      %s21 = sphi 0, %s19
      %s22 = sphi 0, %s20
      %s23 = sphi 0, %s21
      %s31 = sphi 0, %s31
      %s33 = sphi 0, %s31
      %s34 = sphi 0, %s33
      %s48 = sphi 0, %s34
      %s56 = sphi 0, %s58
      %s59 = sphi 0, %s56
      %s60 = sphi 0, %s59
      %s76 = sphi 0, %s60
      %s80 = sphi 0, %s80
      %s82 = sphi 0, %s80
      %s83 = sphi 0, %s82
      %s97 = sphi 0, %s83
      %s101 = sphi 0, %s101
      %s103 = sphi 0, %s101
      %s104 = sphi 0, %s103
      %s118 = sphi 0, %s104
      %s126 = sphi 0, %s128
      %s129 = sphi 0, %s126
      %s130 = sphi 0, %s129
      %s146 = sphi 0, %s130
    $region4: #{autoencoder_forward.3} parent=1 // loop_header_branch
      %14 = sbr.rel (%p12) target = $region8
    $region5: #{autoencoder_forward.3} parent=1 // loop_body
      %s16 = ssub.s32 %s11, 1
      %s17 = ssub.s32 %s11, 2
      %s24 = sadd.s32 1, %s19
      %p25 = scmp.ge.s32.totalorder %s24, 1
      %s26 = scalar_select %p25, 0, %s24
      %s27 = sadd.s32 1, %s18
      %s28 = scalar_select %p25, %s27, %s18
      %p29 = scmp.ge.s32.totalorder %s28, 2
      %s30 = scalar_select %p29, 0, %s28
      %s32 = sadd.s32 %s31, 1
      %p35 = scmp.eq.s32.totalorder %s11, 1
      %p36 = scmp.ne.s32.totalorder %s31, %s33
      %p37 = scmp.eq.s32.totalorder %s11, 0
      %p38 = por %p36, %p37
      %p39 = scmp.ne.s32.totalorder %s31, %s33
      %p40 = scmp.eq.s32.totalorder %s16, 1
      %p41 = por %p39, %p40
      %p42 = scmp.ne.s32.totalorder %s33, %s34
      %p43 = scmp.eq.s32.totalorder %s16, 0
      %p44 = por %p42, %p43
      %p45 = scmp.ne.s32.totalorder %s33, %s34
      %p46 = scmp.eq.s32.totalorder %s17, 1
      %p47 = por %p45, %p46
      %p49 = scmp.ne.s32.totalorder %s34, %s48
      %p50 = scmp.eq.s32.totalorder %s17, 0
      %p51 = por %p49, %p50
      %s52 = ssub.s32 %s18, %s30
      %s53 = ssub.s32 %s19, %s26
      %s54 = sor.u32 %s52, %s53
      %p55 = scmp.eq.s32.totalorder %s54, 0
      %s57 = sadd.s32 %s56, 1
      %s58 = scalar_select %p55, %s56, %s57
      %p61 = pneg %p55
      %p62 = scmp.eq.s32.totalorder %s11, 1
      %p63 = por %p61, %p62
      %p64 = scmp.ne.s32.totalorder %s56, %s59
      %p65 = scmp.eq.s32.totalorder %s11, 0
      %p66 = por %p64, %p65
      %p67 = scmp.ne.s32.totalorder %s56, %s59
      %p68 = scmp.eq.s32.totalorder %s16, 1
      %p69 = por %p67, %p68
      %p70 = scmp.ne.s32.totalorder %s59, %s60
      %p71 = scmp.eq.s32.totalorder %s16, 0
      %p72 = por %p70, %p71
      %p73 = scmp.ne.s32.totalorder %s59, %s60
      %p74 = scmp.eq.s32.totalorder %s17, 1
      %p75 = por %p73, %p74
      %p77 = scmp.ne.s32.totalorder %s60, %s76
      %p78 = scmp.eq.s32.totalorder %s17, 0
      %p79 = por %p77, %p78
      %s81 = sadd.s32 %s80, 1
      %p84 = scmp.eq.s32.totalorder %s11, 1
      %p85 = scmp.ne.s32.totalorder %s80, %s82
      %p86 = scmp.eq.s32.totalorder %s11, 0
      %p87 = por %p85, %p86
      %p88 = scmp.ne.s32.totalorder %s80, %s82
      %p89 = scmp.eq.s32.totalorder %s16, 1
      %p90 = por %p88, %p89
      %p91 = scmp.ne.s32.totalorder %s82, %s83
      %p92 = scmp.eq.s32.totalorder %s16, 0
      %p93 = por %p91, %p92
      %p94 = scmp.ne.s32.totalorder %s82, %s83
      %p95 = scmp.eq.s32.totalorder %s17, 1
      %p96 = por %p94, %p95
      %p98 = scmp.ne.s32.totalorder %s83, %s97
      %p99 = scmp.eq.s32.totalorder %s17, 0
      %p100 = por %p98, %p99
      %s102 = sadd.s32 %s101, 1
      %p105 = scmp.eq.s32.totalorder %s11, 1
      %p106 = scmp.ne.s32.totalorder %s101, %s103
      %p107 = scmp.eq.s32.totalorder %s11, 0
      %p108 = por %p106, %p107
      %p109 = scmp.ne.s32.totalorder %s101, %s103
      %p110 = scmp.eq.s32.totalorder %s16, 1
      %p111 = por %p109, %p110
      %p112 = scmp.ne.s32.totalorder %s103, %s104
      %p113 = scmp.eq.s32.totalorder %s16, 0
      %p114 = por %p112, %p113
      %p115 = scmp.ne.s32.totalorder %s103, %s104
      %p116 = scmp.eq.s32.totalorder %s17, 1
      %p117 = por %p115, %p116
      %p119 = scmp.ne.s32.totalorder %s104, %s118
      %p120 = scmp.eq.s32.totalorder %s17, 0
      %p121 = por %p119, %p120
      %s122 = ssub.s32 %s18, %s30
      %s123 = ssub.s32 %s19, %s26
      %s124 = sor.u32 %s122, %s123
      %p125 = scmp.eq.s32.totalorder %s124, 0
      %s127 = sadd.s32 %s126, 1
      %s128 = scalar_select %p125, %s126, %s127
      %p131 = pneg %p125
      %p132 = scmp.eq.s32.totalorder %s11, 1
      %p133 = por %p131, %p132
      %p134 = scmp.ne.s32.totalorder %s126, %s129
      %p135 = scmp.eq.s32.totalorder %s11, 0
      %p136 = por %p134, %p135
      %p137 = scmp.ne.s32.totalorder %s126, %s129
      %p138 = scmp.eq.s32.totalorder %s16, 1
      %p139 = por %p137, %p138
      %p140 = scmp.ne.s32.totalorder %s129, %s130
      %p141 = scmp.eq.s32.totalorder %s16, 0
      %p142 = por %p140, %p141
      %p143 = scmp.ne.s32.totalorder %s129, %s130
      %p144 = scmp.eq.s32.totalorder %s17, 1
      %p145 = por %p143, %p144
      %p147 = scmp.ne.s32.totalorder %s130, %s146
      %p148 = scmp.eq.s32.totalorder %s17, 0
      %p149 = por %p147, %p148
      %p150 = scmp.le.s32.totalorder 1, %s11
      %p151 = scmp.lt.s32.totalorder %s11, 3
      %p152 = pnand %p150, %p151
      %p153 = pneg %p152
      // Predicated region
      $region9: #{autoencoder_forward.3} parent=5 // pred_check
        _
      $region10: #{autoencoder_forward.3} parent=5 // pred_check_branch
        %155 = sbr.rel (%p152) target = $region12
      $region11: #{autoencoder_forward.3} parent=5 // pred_region
        %s156 = ssub.s32 %s11, 1
        // Predicated region
        $region13: #{autoencoder_forward.3} parent=11 // pred_check
          %p157 = pneg %p44
        $region14: #{autoencoder_forward.3} parent=11 // pred_check_branch
          %159 = sbr.rel (%p157) target = $region16
        $region15: #{autoencoder_forward.3} parent=11 // pred_region
          %s161 = ssub.s32 16, 16
          %162 = vsyncadd [#allocation3], %s161
          %s164 = sshll.u32 %s0, 4
          %s165 = int_to_ptr.vmem [resolvable:$true] %s164
          %167 = dma.vmem_to_smem %s165, 16, [#allocation2], [#allocation3]
        $region16: #{autoencoder_forward.3} parent=11 // pred_fallthru
          _
        // Predicated region
        $region17: #{autoencoder_forward.3} parent=11 // pred_check
          %p168 = pneg %p93
        $region18: #{autoencoder_forward.3} parent=11 // pred_check_branch
          %170 = sbr.rel (%p168) target = $region20
        $region19: #{autoencoder_forward.3} parent=11 // pred_region
          _
        $region20: #{autoencoder_forward.3} parent=11 // pred_fallthru
          _
        // Predicated region
        $region21: #{autoencoder_forward.3} parent=11 // pred_check
          %p171 = pneg %p114
        $region22: #{autoencoder_forward.3} parent=11 // pred_check_branch
          %173 = sbr.rel (%p171) target = $region24
        $region23: #{autoencoder_forward.3} parent=11 // pred_region
          _
        $region24: #{autoencoder_forward.3} parent=11 // pred_fallthru
          _
      $region12: #{autoencoder_forward.3} parent=5 // pred_fallthru
        _
      %p174 = scmp.lt.s32.totalorder %s11, 2
      // Predicated region
      $region25: #{autoencoder_forward.3} parent=5 // pred_check
        %p175 = pneg %p174
      $region26: #{autoencoder_forward.3} parent=5 // pred_check_branch
        %177 = sbr.rel (%p175) target = $region28
      $region27: #{autoencoder_forward.3} parent=5 // pred_region
        // Predicated region
        $region29: #{autoencoder_forward.3} parent=27 // pred_check
          %p178 = pneg %p66
        $region30: #{autoencoder_forward.3} parent=27 // pred_check_branch
          %180 = sbr.rel (%p178) target = $region32
        $region31: #{autoencoder_forward.3} parent=27 // pred_region
          %s181 = smul.u32 2, %s19
          %p182 = scmp.lt.s32.totalorder %s18, 1
          %s183 = scalar_select %p182, %s18, 1
          %p184 = scmp.lt.s32.totalorder %s181, 1
          %s185 = scalar_select %p184, %s181, 1
          %s186 = smul.addr %s183, 2
          %s187 = sadd.s32 %s185, %s186
          %s188 = smul.addr %s187, 2
          %s189 = scalar_lea.vmem %s1, %s188
          %s190 = smul.u32 2, %s19
        $region32: #{autoencoder_forward.3} parent=27 // pred_fallthru
          _
      $region28: #{autoencoder_forward.3} parent=5 // pred_fallthru
        _
      %p191 = scmp.le.s32.totalorder 1, %s11
      %p192 = scmp.lt.s32.totalorder %s11, 3
      %p193 = pnand %p191, %p192
      %p194 = pneg %p193
      // Predicated region
      $region33: #{autoencoder_forward.3} parent=5 // pred_check
        _
      $region34: #{autoencoder_forward.3} parent=5 // pred_check_branch
        %196 = sbr.rel (%p193) target = $region36
      $region35: #{autoencoder_forward.3} parent=5 // pred_region
        %s197 = ssub.s32 %s11, 1
        // Predicated region
        $region37: #{autoencoder_forward.3} parent=35 // pred_check
          %p198 = pneg %p44
        $region38: #{autoencoder_forward.3} parent=35 // pred_check_branch
          %200 = sbr.rel (%p198) target = $region40
        $region39: #{autoencoder_forward.3} parent=35 // pred_region
          %201 = dma.done [#allocation3], 16
        $region40: #{autoencoder_forward.3} parent=35 // pred_fallthru
          _
        %202 = sfence
        %p203 = pneg %p44
        %p204 = pneg %p41
        %s205 = smul.u32 2, %s21
        %p206 = scmp.lt.s32.totalorder %s20, 1
        %s207 = scalar_select %p206, %s20, 1
        %p208 = scmp.lt.s32.totalorder %s205, 1
        %s209 = scalar_select %p208, %s205, 1
        %s210 = smul.addr %s207, 2
        %s211 = sadd.s32 %s209, %s210
        %s212 = smul.addr %s211, 2
        %s213 = scalar_lea.vmem %s1, %s212
        %p214 = pneg %p72
        %p215 = pneg %p69
        %p216 = pneg %p93
        %p217 = pneg %p90
        %p218 = pneg %p114
        %p219 = pneg %p111
        %p220 = pneg %p142
        %p221 = pneg %p139
        %s222 = smul.u32 2, %s21
        %p223 = scmp.lt.s32.totalorder %s20, 1
        %s224 = scalar_select %p223, %s20, 1
        %p225 = scmp.lt.s32.totalorder %s222, 1
        %s226 = scalar_select %p225, %s222, 1
        %s227 = smul.addr %s224, 2
        %s228 = sadd.s32 %s226, %s227
        %s229 = smul.addr %s228, 8
        %s230 = scalar_lea.vmem %s4, %s229
        %s231 = smul.u32 2, %s21
        %p232 = scmp.lt.s32.totalorder %s20, 1
        %s233 = scalar_select %p232, %s20, 1
        %p234 = scmp.lt.s32.totalorder %s231, 1
        %s235 = scalar_select %p234, %s231, 1
        %s236 = smul.addr %s233, 2
        %s237 = sadd.s32 %s235, %s236
        %s238 = smul.addr %s237, 2
        %s239 = scalar_lea.vmem %s1, %s238
        %s240 = smul.u32 2, %s21
        %s241 = smul.u32 2, %s21
        %p242 = scmp.lt.s32.totalorder %s20, 1
        %s243 = scalar_select %p242, %s20, 1
        %p244 = scmp.lt.s32.totalorder %s241, 1
        %s245 = scalar_select %p244, %s241, 1
        %s246 = smul.addr %s243, 2
        %s247 = sadd.s32 %s245, %s246
        %s248 = smul.addr %s247, 8
        %s249 = scalar_lea.vmem %s4, %s248
        %s250 = smul.u32 2, %s21
        %s251 = sld [smem:[#allocation2]]
        %s252 = sld [smem:[#allocation2 + $0x1]]
        %s253 = sld [smem:[#allocation2 + $0x2]]
        %v254 = vld [vmem:[%s239] sm:$0xf]
        %v255 = vstv %s251
        %v256 = vsub.f32 %v254, %v255
        %v257 = vstv %s252
        %v258 = vmul.f32 %v256, %v257
        %v259 = vsub.f32 %v258, 0.5
        %v260 = vround.ne.pseudo %v259
        %v261 = vstv %s253
        %v262 = vmul.f32 %v260, %v261
        %v263 = vadd.f32 %v262, %v255
        %v264 = vld [vmem:[%s2] sm:$0xff]
        %v265 = vld [vmem:[%s3] sm:$0xff]
        %267 = vset.pattern.permute.xlu0 0
        %268 = vperm.xlu0 %267, %v265
        %v269 = vpop.permute.xlu0 %268
        %v273 = vunpack.c.l.s4 1983009808
        %v274 = vunpack.c.0.s8 %v273
        %v275 = vlaneseq
        %v276 = vshrl.u32 %v275, 7
        %v277 = vsub.s32 %v274, %v276
        %v278 = vrot.slane %v263, %v277
        %v279 = vcombine.high %v278, %v278
        %vm280 = vcmask 15360
        %v282 = vsel %vm280, %v264, 0
        %vm284 = vcmask 1041408
        %v285 = vsel %vm284, %v278, 0
        %v287 = vsel %vm284, %v279, 0
        %289 = vmatprep.subr.mxu0 %v287
        %290 = vmatpush1.msra.mxu0 %v285
        %291 = vmatprep.subr.mxu0 0.0
        %292 = vmatpush1.msra.mxu0 0.0
        %293 = vmatprep.subr.mxu0 0.0
        %294 = vmatpush1.msra.mxu0 0.0
        %295 = vmatprep.subr.mxu0 0.0
        %296 = vmatpush1.msra.mxu0 0.0
        %297 = vmatprep.subr.mxu0 0.0
        %298 = vmatpush1.msra.mxu0 0.0
        %299 = vmatprep.subr.mxu0 0.0
        %300 = vmatpush1.msra.mxu0 0.0
        %301 = vmatprep.subr.mxu0 0.0
        %302 = vmatpush1.msra.mxu0 0.0
        %303 = vmatprep.subr.mxu0 0.0
        %304 = vmatpush1.msra.mxu0 0.0
        %305 = vmatprep.subr.mxu0 0.0
        %306 = vmatpush1.msra.mxu0 0.0
        %307 = vmatprep.subr.mxu0 0.0
        %308 = vmatpush1.msra.mxu0 0.0
        %309 = vmatprep.subr.mxu0 0.0
        %310 = vmatpush1.msra.mxu0 0.0
        %311 = vmatprep.subr.mxu0 0.0
        %312 = vmatpush1.msra.mxu0 0.0
        %313 = vmatprep.subr.mxu0 0.0
        %314 = vmatpush1.msra.mxu0 0.0
        %315 = vmatprep.subr.mxu0 0.0
        %316 = vmatpush1.msra.mxu0 0.0
        %317 = vmatprep.subr.mxu0 0.0
        %318 = vmatpush1.msra.mxu0 0.0
        %319 = vmatprep.subr.mxu0 0.0
        %320 = vmatpush1.msra.mxu0 0.0
        %321 = vmatprep.subr.mxu0 0.0
        %322 = vmatpush1.msra.mxu0 0.0
        %323 = vmatprep.subr.mxu0 0.0
        %324 = vmatpush1.msra.mxu0 0.0
        %325 = vmatprep.subr.mxu0 0.0
        %326 = vmatpush1.msra.mxu0 0.0
        %327 = vmatprep.subr.mxu0 0.0
        %328 = vmatpush1.msra.mxu0 0.0
        %329 = vmatprep.subr.mxu0 0.0
        %330 = vmatpush1.msra.mxu0 0.0
        %331 = vmatprep.subr.mxu0 0.0
        %332 = vmatpush1.msra.mxu0 0.0
        %333 = vmatprep.subr.mxu0 0.0
        %334 = vmatpush1.msra.mxu0 0.0
        %335 = vmatprep.subr.mxu0 0.0
        %336 = vmatpush1.msra.mxu0 0.0
        %337 = vmatprep.subr.mxu0 0.0
        %338 = vmatpush1.msra.mxu0 0.0
        %339 = vmatprep.subr.mxu0 0.0
        %340 = vmatpush1.msra.mxu0 0.0
        %341 = vmatprep.subr.mxu0 0.0
        %342 = vmatpush1.msra.mxu0 0.0
        %343 = vmatprep.subr.mxu0 0.0
        %344 = vmatpush1.msra.mxu0 0.0
        %345 = vmatprep.subr.mxu0 0.0
        %346 = vmatpush1.msra.mxu0 0.0
        %347 = vmatprep.subr.mxu0 0.0
        %348 = vmatpush1.msra.mxu0 0.0
        %349 = vmatprep.subr.mxu0 0.0
        %350 = vmatpush1.msra.mxu0 0.0
        %351 = vmatprep.subr.mxu0 0.0
        %352 = vmatpush1.msra.mxu0 0.0
        %353 = vmatprep.mubr.f32.mxu0 0.0
        %354 = vmatmul.mubr.f32.gmra.mrb[0].mxu0 %v282
        %v355 = vpop.f32.mrb[0].mxu0
        %v356 = vadd.f32 %v269, %v355
        %v357 = vpop.f32.mrb[0].mxu0
        %v358 = vadd.f32 %v269, %v357
        %359 = vdwg.mxu0
        %360 = vst [vmem:[%s249] sm:$0xff] %v356
        %361 = vst [vmem:[%s249 + $0x8] sm:$0xff] %v358
        %s362 = smul.u32 2, %s21
        %p363 = scmp.lt.s32.totalorder %s20, 1
        %s364 = scalar_select %p363, %s20, 1
        %p365 = scmp.lt.s32.totalorder %s362, 1
        %s366 = scalar_select %p365, %s362, 1
        %s367 = smul.addr %s364, 2
        %s368 = sadd.s32 %s366, %s367
        %s369 = smul.addr %s368, 8
        %s370 = scalar_lea.vmem %s4, %s369
        // Predicated region
        $region41: #{autoencoder_forward.3} parent=35 // pred_check
          %p371 = pneg %p139
        $region42: #{autoencoder_forward.3} parent=35 // pred_check_branch
          %373 = sbr.rel (%p371) target = $region44
        $region43: #{autoencoder_forward.3} parent=35 // pred_region
          %s374 = smul.u32 2, %s21
        $region44: #{autoencoder_forward.3} parent=35 // pred_fallthru
          _
      $region36: #{autoencoder_forward.3} parent=5 // pred_fallthru
        _
      %p375 = scmp.le.s32.totalorder 2, %s11
      // Predicated region
      $region45: #{autoencoder_forward.3} parent=5 // pred_check
        %p376 = pneg %p375
      $region46: #{autoencoder_forward.3} parent=5 // pred_check_branch
        %378 = sbr.rel (%p376) target = $region48
      $region47: #{autoencoder_forward.3} parent=5 // pred_region
        %s379 = ssub.s32 %s11, 2
        // Predicated region
        $region49: #{autoencoder_forward.3} parent=47 // pred_check
          %p380 = pneg %p145
        $region50: #{autoencoder_forward.3} parent=47 // pred_check_branch
          %382 = sbr.rel (%p380) target = $region52
        $region51: #{autoencoder_forward.3} parent=47 // pred_region
          %s383 = smul.u32 2, %s23
          %p384 = scmp.lt.s32.totalorder %s22, 1
          %s385 = scalar_select %p384, %s22, 1
          %p386 = scmp.lt.s32.totalorder %s383, 1
          %s387 = scalar_select %p386, %s383, 1
          %s388 = smul.addr %s385, 2
          %s389 = sadd.s32 %s387, %s388
          %s390 = smul.addr %s389, 8
          %s391 = scalar_lea.vmem %s4, %s390
        $region52: #{autoencoder_forward.3} parent=47 // pred_fallthru
          _
      $region48: #{autoencoder_forward.3} parent=5 // pred_fallthru
        _
    $region6: #{autoencoder_forward.3} parent=1 // loop_footer
      %s15 = sadd.s32 1, %s11
    $region7: #{autoencoder_forward.3} parent=1 // loop_footer_branch
      %10 = sbr.rel target = $region3
    $region8: #{autoencoder_forward.3} parent=1 // loop_exit
      _
    %392 = vsyncpa [#allocation3], 1
    %s393 = scalar_lea.sflag [#allocation3], 1
    %394 = vsyncpa %s393, 1

// kernel: autoencoder_forward.2
$region0: #{autoencoder_forward.2}
  #allocation0 [shape = 'u32[]', space=smem, size = 0x4, offset = 0x4, fixed_abs, tag = 'smem constant byte address 0x4 - core index']
  #allocation1 [shape = 'u32[144,128]{1,0:T(1,128)}', space=vmem, size = 0x12000, scoped, tag = 'internal scratch']
  %s0 = inlined_call_operand.vmem [shape: f32[2,8,256], index: 0, kind: input, shape index: {}]
  %s1 = inlined_call_operand.vmem [shape: f32[2,8], index: 1, kind: input, shape index: {}]
  %s2 = inlined_call_operand.vmem [shape: f32[2,1], index: 2, kind: input, shape index: {}]
  %s3 = inlined_call_operand.vmem [shape: f32[2,2,256], index: 3, kind: output, shape index: {0}]
  %s4 = inlined_call_operand.vmem [shape: f32[2,1,8,128], index: 4, kind: output, shape index: {1}]
  %s5 = inlined_call_operand.vmem [shape: f32[2,1,8,128], index: 5, kind: output, shape index: {2}]
  %6 = xla_tuple %s3, %s4, %s5
  %s7 = sld [smem:[#allocation0]]
  $region61: #{autoencoder_forward.2} parent=0
    _
  %s9 = ssub.s32 1, %s7
  %s10 = scalar_select 0, %s9, %s7
  loop: start=0, step=1, limit=4
  $region2: #{autoencoder_forward.2} parent=0 // loop_pre_header
    _
  $region3: #{autoencoder_forward.2} parent=0 // loop_header
    %s12 = sphi 0, %s16
    %p13 = scmp.ge.s32.totalorder %s12, 4
    %s19 = sphi 0, %s31
    %s20 = sphi 0, %s27
    %s21 = sphi 0, %s19
    %s22 = sphi 0, %s20
    %s23 = sphi 0, %s21
    %s24 = sphi 0, %s22
    %s36 = sphi 0, %s38
    %s39 = sphi 0, %s36
    %s40 = sphi 0, %s39
    %s56 = sphi 0, %s40
    %s60 = sphi 0, %s60
    %s62 = sphi 0, %s60
    %s63 = sphi 0, %s62
    %s77 = sphi 0, %s63
    %s81 = sphi 0, %s81
    %s83 = sphi 0, %s81
    %s84 = sphi 0, %s83
    %s98 = sphi 0, %s84
    %s106 = sphi 0, %s108
    %s109 = sphi 0, %s106
    %s110 = sphi 0, %s109
    %s126 = sphi 0, %s110
    %s134 = sphi 0, %s136
    %s137 = sphi 0, %s134
    %s138 = sphi 0, %s137
    %s154 = sphi 0, %s138
    %s162 = sphi 0, %s164
    %s165 = sphi 0, %s162
    %s166 = sphi 0, %s165
    %s182 = sphi 0, %s166
  $region4: #{autoencoder_forward.2} parent=0 // loop_header_branch
    %15 = sbr.rel (%p13) target = $region8
  $region5: #{autoencoder_forward.2} parent=0 // loop_body
    %s17 = ssub.s32 %s12, 1
    %s18 = ssub.s32 %s12, 2
    %s25 = sadd.s32 1, %s20
    %p26 = scmp.ge.s32.totalorder %s25, 1
    %s27 = scalar_select %p26, 0, %s25
    %s28 = sadd.s32 1, %s19
    %s29 = scalar_select %p26, %s28, %s19
    %p30 = scmp.ge.s32.totalorder %s29, 2
    %s31 = scalar_select %p30, 0, %s29
    %s32 = ssub.s32 %s19, %s31
    %s33 = ssub.s32 %s20, %s27
    %s34 = sor.u32 %s32, %s33
    %p35 = scmp.eq.s32.totalorder %s34, 0
    %s37 = sadd.s32 %s36, 1
    %s38 = scalar_select %p35, %s36, %s37
    %p41 = pneg %p35
    %p42 = scmp.eq.s32.totalorder %s12, 1
    %p43 = por %p41, %p42
    %p44 = scmp.ne.s32.totalorder %s36, %s39
    %p45 = scmp.eq.s32.totalorder %s12, 0
    %p46 = por %p44, %p45
    %p47 = scmp.ne.s32.totalorder %s36, %s39
    %p48 = scmp.eq.s32.totalorder %s17, 1
    %p49 = por %p47, %p48
    %p50 = scmp.ne.s32.totalorder %s39, %s40
    %p51 = scmp.eq.s32.totalorder %s17, 0
    %p52 = por %p50, %p51
    %p53 = scmp.ne.s32.totalorder %s39, %s40
    %p54 = scmp.eq.s32.totalorder %s18, 1
    %p55 = por %p53, %p54
    %p57 = scmp.ne.s32.totalorder %s40, %s56
    %p58 = scmp.eq.s32.totalorder %s18, 0
    %p59 = por %p57, %p58
    %s61 = sadd.s32 %s60, 1
    %p64 = scmp.eq.s32.totalorder %s12, 1
    %p65 = scmp.ne.s32.totalorder %s60, %s62
    %p66 = scmp.eq.s32.totalorder %s12, 0
    %p67 = por %p65, %p66
    %p68 = scmp.ne.s32.totalorder %s60, %s62
    %p69 = scmp.eq.s32.totalorder %s17, 1
    %p70 = por %p68, %p69
    %p71 = scmp.ne.s32.totalorder %s62, %s63
    %p72 = scmp.eq.s32.totalorder %s17, 0
    %p73 = por %p71, %p72
    %p74 = scmp.ne.s32.totalorder %s62, %s63
    %p75 = scmp.eq.s32.totalorder %s18, 1
    %p76 = por %p74, %p75
    %p78 = scmp.ne.s32.totalorder %s63, %s77
    %p79 = scmp.eq.s32.totalorder %s18, 0
    %p80 = por %p78, %p79
    %s82 = sadd.s32 %s81, 1
    %p85 = scmp.eq.s32.totalorder %s12, 1
    %p86 = scmp.ne.s32.totalorder %s81, %s83
    %p87 = scmp.eq.s32.totalorder %s12, 0
    %p88 = por %p86, %p87
    %p89 = scmp.ne.s32.totalorder %s81, %s83
    %p90 = scmp.eq.s32.totalorder %s17, 1
    %p91 = por %p89, %p90
    %p92 = scmp.ne.s32.totalorder %s83, %s84
    %p93 = scmp.eq.s32.totalorder %s17, 0
    %p94 = por %p92, %p93
    %p95 = scmp.ne.s32.totalorder %s83, %s84
    %p96 = scmp.eq.s32.totalorder %s18, 1
    %p97 = por %p95, %p96
    %p99 = scmp.ne.s32.totalorder %s84, %s98
    %p100 = scmp.eq.s32.totalorder %s18, 0
    %p101 = por %p99, %p100
    %s102 = ssub.s32 %s19, %s31
    %s103 = ssub.s32 %s20, %s27
    %s104 = sor.u32 %s102, %s103
    %p105 = scmp.eq.s32.totalorder %s104, 0
    %s107 = sadd.s32 %s106, 1
    %s108 = scalar_select %p105, %s106, %s107
    %p111 = pneg %p105
    %p112 = scmp.eq.s32.totalorder %s12, 1
    %p113 = por %p111, %p112
    %p114 = scmp.ne.s32.totalorder %s106, %s109
    %p115 = scmp.eq.s32.totalorder %s12, 0
    %p116 = por %p114, %p115
    %p117 = scmp.ne.s32.totalorder %s106, %s109
    %p118 = scmp.eq.s32.totalorder %s17, 1
    %p119 = por %p117, %p118
    %p120 = scmp.ne.s32.totalorder %s109, %s110
    %p121 = scmp.eq.s32.totalorder %s17, 0
    %p122 = por %p120, %p121
    %p123 = scmp.ne.s32.totalorder %s109, %s110
    %p124 = scmp.eq.s32.totalorder %s18, 1
    %p125 = por %p123, %p124
    %p127 = scmp.ne.s32.totalorder %s110, %s126
    %p128 = scmp.eq.s32.totalorder %s18, 0
    %p129 = por %p127, %p128
    %s130 = ssub.s32 %s19, %s31
    %s131 = ssub.s32 %s20, %s27
    %s132 = sor.u32 %s130, %s131
    %p133 = scmp.eq.s32.totalorder %s132, 0
    %s135 = sadd.s32 %s134, 1
    %s136 = scalar_select %p133, %s134, %s135
    %p139 = pneg %p133
    %p140 = scmp.eq.s32.totalorder %s12, 1
    %p141 = por %p139, %p140
    %p142 = scmp.ne.s32.totalorder %s134, %s137
    %p143 = scmp.eq.s32.totalorder %s12, 0
    %p144 = por %p142, %p143
    %p145 = scmp.ne.s32.totalorder %s134, %s137
    %p146 = scmp.eq.s32.totalorder %s17, 1
    %p147 = por %p145, %p146
    %p148 = scmp.ne.s32.totalorder %s137, %s138
    %p149 = scmp.eq.s32.totalorder %s17, 0
    %p150 = por %p148, %p149
    %p151 = scmp.ne.s32.totalorder %s137, %s138
    %p152 = scmp.eq.s32.totalorder %s18, 1
    %p153 = por %p151, %p152
    %p155 = scmp.ne.s32.totalorder %s138, %s154
    %p156 = scmp.eq.s32.totalorder %s18, 0
    %p157 = por %p155, %p156
    %s158 = ssub.s32 %s19, %s31
    %s159 = ssub.s32 %s20, %s27
    %s160 = sor.u32 %s158, %s159
    %p161 = scmp.eq.s32.totalorder %s160, 0
    %s163 = sadd.s32 %s162, 1
    %s164 = scalar_select %p161, %s162, %s163
    %p167 = pneg %p161
    %p168 = scmp.eq.s32.totalorder %s12, 1
    %p169 = por %p167, %p168
    %p170 = scmp.ne.s32.totalorder %s162, %s165
    %p171 = scmp.eq.s32.totalorder %s12, 0
    %p172 = por %p170, %p171
    %p173 = scmp.ne.s32.totalorder %s162, %s165
    %p174 = scmp.eq.s32.totalorder %s17, 1
    %p175 = por %p173, %p174
    %p176 = scmp.ne.s32.totalorder %s165, %s166
    %p177 = scmp.eq.s32.totalorder %s17, 0
    %p178 = por %p176, %p177
    %p179 = scmp.ne.s32.totalorder %s165, %s166
    %p180 = scmp.eq.s32.totalorder %s18, 1
    %p181 = por %p179, %p180
    %p183 = scmp.ne.s32.totalorder %s166, %s182
    %p184 = scmp.eq.s32.totalorder %s18, 0
    %p185 = por %p183, %p184
    %p186 = scmp.le.s32.totalorder 1, %s12
    %p187 = scmp.lt.s32.totalorder %s12, 3
    %p188 = pnand %p186, %p187
    %p189 = pneg %p188
    // Predicated region
    $region9: #{autoencoder_forward.2} parent=5 // pred_check
      _
    $region10: #{autoencoder_forward.2} parent=5 // pred_check_branch
      %191 = sbr.rel (%p188) target = $region12
    $region11: #{autoencoder_forward.2} parent=5 // pred_region
      %s192 = ssub.s32 %s12, 1
      // Predicated region
      $region13: #{autoencoder_forward.2} parent=11 // pred_check
        %p193 = pneg %p73
      $region14: #{autoencoder_forward.2} parent=11 // pred_check_branch
        %195 = sbr.rel (%p193) target = $region16
      $region15: #{autoencoder_forward.2} parent=11 // pred_region
        _
      $region16: #{autoencoder_forward.2} parent=11 // pred_fallthru
        _
      // Predicated region
      $region17: #{autoencoder_forward.2} parent=11 // pred_check
        %p196 = pneg %p94
      $region18: #{autoencoder_forward.2} parent=11 // pred_check_branch
        %198 = sbr.rel (%p196) target = $region20
      $region19: #{autoencoder_forward.2} parent=11 // pred_region
        _
      $region20: #{autoencoder_forward.2} parent=11 // pred_fallthru
        _
    $region12: #{autoencoder_forward.2} parent=5 // pred_fallthru
      _
    %p199 = scmp.lt.s32.totalorder %s12, 2
    // Predicated region
    $region21: #{autoencoder_forward.2} parent=5 // pred_check
      %p200 = pneg %p199
    $region22: #{autoencoder_forward.2} parent=5 // pred_check_branch
      %202 = sbr.rel (%p200) target = $region24
    $region23: #{autoencoder_forward.2} parent=5 // pred_region
      // Predicated region
      $region25: #{autoencoder_forward.2} parent=23 // pred_check
        %p203 = pneg %p46
      $region26: #{autoencoder_forward.2} parent=23 // pred_check_branch
        %205 = sbr.rel (%p203) target = $region28
      $region27: #{autoencoder_forward.2} parent=23 // pred_region
        %s206 = smul.u32 2, %s20
        %p207 = scmp.lt.s32.totalorder %s19, 1
        %s208 = scalar_select %p207, %s19, 1
        %p209 = scmp.lt.s32.totalorder %s206, 1
        %s210 = scalar_select %p209, %s206, 1
        %s211 = smul.addr %s208, 2
        %s212 = sadd.s32 %s210, %s211
        %s213 = smul.addr %s212, 8
        %s214 = scalar_lea.vmem %s0, %s213
        %s215 = smul.u32 2, %s20
      $region28: #{autoencoder_forward.2} parent=23 // pred_fallthru
        _
    $region24: #{autoencoder_forward.2} parent=5 // pred_fallthru
      _
    %p216 = scmp.le.s32.totalorder 1, %s12
    %p217 = scmp.lt.s32.totalorder %s12, 3
    %p218 = pnand %p216, %p217
    %p219 = pneg %p218
    // Predicated region
    $region29: #{autoencoder_forward.2} parent=5 // pred_check
      _
    $region30: #{autoencoder_forward.2} parent=5 // pred_check_branch
      %221 = sbr.rel (%p218) target = $region32
    $region31: #{autoencoder_forward.2} parent=5 // pred_region
      %s222 = ssub.s32 %s12, 1
      %s223 = smul.u32 2, %s22
      %p224 = scmp.lt.s32.totalorder %s21, 1
      %s225 = scalar_select %p224, %s21, 1
      %p226 = scmp.lt.s32.totalorder %s223, 1
      %s227 = scalar_select %p226, %s223, 1
      %s228 = smul.addr %s225, 2
      %s229 = sadd.s32 %s227, %s228
      %s230 = smul.addr %s229, 8
      %s231 = scalar_lea.vmem %s0, %s230
      %p232 = pneg %p52
      %p233 = pneg %p49
      %p234 = pneg %p73
      %p235 = pneg %p70
      %p236 = pneg %p94
      %p237 = pneg %p91
      %p238 = pneg %p122
      %p239 = pneg %p119
      %s240 = smul.u32 2, %s22
      %p241 = scmp.lt.s32.totalorder %s21, 1
      %s242 = scalar_select %p241, %s21, 1
      %p243 = scmp.lt.s32.totalorder %s240, 1
      %s244 = scalar_select %p243, %s240, 1
      %s245 = smul.addr %s242, 2
      %s246 = sadd.s32 %s244, %s245
      %s247 = smul.addr %s246, 2
      %s248 = scalar_lea.vmem %s3, %s247
      %p249 = pneg %p150
      %p250 = pneg %p147
      %p251 = scmp.lt.s32.totalorder %s21, 1
      %s252 = scalar_select %p251, %s21, 1
      %p253 = scmp.lt.s32.totalorder %s22, 0
      %s254 = scalar_select %p253, %s22, 0
      %s255 = sadd.s32 %s254, %s252
      %s256 = smul.addr %s255, 8
      %s257 = scalar_lea.vmem %s4, %s256
      %p258 = pneg %p178
      %p259 = pneg %p175
      %p260 = scmp.lt.s32.totalorder %s21, 1
      %s261 = scalar_select %p260, %s21, 1
      %p262 = scmp.lt.s32.totalorder %s22, 0
      %s263 = scalar_select %p262, %s22, 0
      %s264 = sadd.s32 %s263, %s261
      %s265 = smul.addr %s264, 8
      %s266 = scalar_lea.vmem %s5, %s265
      %s267 = smul.u32 2, %s22
      %p268 = scmp.lt.s32.totalorder %s21, 1
      %s269 = scalar_select %p268, %s21, 1
      %p270 = scmp.lt.s32.totalorder %s267, 1
      %s271 = scalar_select %p270, %s267, 1
      %s272 = smul.addr %s269, 2
      %s273 = sadd.s32 %s271, %s272
      %s274 = smul.addr %s273, 8
      %s275 = scalar_lea.vmem %s0, %s274
      %s276 = smul.u32 2, %s22
      %s277 = smul.u32 2, %s22
      %p278 = scmp.lt.s32.totalorder %s21, 1
      %s279 = scalar_select %p278, %s21, 1
      %p280 = scmp.lt.s32.totalorder %s277, 1
      %s281 = scalar_select %p280, %s277, 1
      %s282 = smul.addr %s279, 2
      %s283 = sadd.s32 %s281, %s282
      %s284 = smul.addr %s283, 2
      %s285 = scalar_lea.vmem %s3, %s284
      %s286 = smul.u32 2, %s22
      %p287 = scmp.lt.s32.totalorder %s21, 1
      %s288 = scalar_select %p287, %s21, 1
      %p289 = scmp.lt.s32.totalorder %s22, 0
      %s290 = scalar_select %p289, %s22, 0
      %s291 = sadd.s32 %s290, %s288
      %s292 = smul.addr %s291, 8
      %s293 = scalar_lea.vmem %s4, %s292
      %p294 = scmp.lt.s32.totalorder %s21, 1
      %s295 = scalar_select %p294, %s21, 1
      %p296 = scmp.lt.s32.totalorder %s22, 0
      %s297 = scalar_select %p296, %s22, 0
      %s298 = sadd.s32 %s297, %s295
      %s299 = smul.addr %s298, 8
      %s300 = scalar_lea.vmem %s5, %s299
      %v301 = vld [vmem:[%s1] sm:$0x3]
      %v302 = vld [vmem:[%s275] sm:$0xff]
      %v303 = vld [vmem:[%s275 + $0x8] sm:$0xff]
      %v304 = vld [vmem:[%s2] sm:$0x3]
      %306 = vset.pattern.permute.xlu0 0
      %307 = vperm.xlu0 %306, %v304
      %v308 = vpop.permute.xlu0 %307
      %vm310 = vcmask 64512
      %v312 = vsel %vm310, %v301, 0
      %314 = vmatprep.subr.mxu0 %v303
      %315 = vmatpush1.msra.mxu0 %v302
      %316 = vmatprep.subr.mxu0 0.0
      %317 = vmatpush1.msra.mxu0 0.0
      %318 = vmatprep.subr.mxu0 0.0
      %319 = vmatpush1.msra.mxu0 0.0
      %320 = vmatprep.subr.mxu0 0.0
      %321 = vmatpush1.msra.mxu0 0.0
      %322 = vmatprep.subr.mxu0 0.0
      %323 = vmatpush1.msra.mxu0 0.0
      %324 = vmatprep.subr.mxu0 0.0
      %325 = vmatpush1.msra.mxu0 0.0
      %326 = vmatprep.subr.mxu0 0.0
      %327 = vmatpush1.msra.mxu0 0.0
      %328 = vmatprep.subr.mxu0 0.0
      %329 = vmatpush1.msra.mxu0 0.0
      %330 = vmatprep.subr.mxu0 0.0
      %331 = vmatpush1.msra.mxu0 0.0
      %332 = vmatprep.subr.mxu0 0.0
      %333 = vmatpush1.msra.mxu0 0.0
      %334 = vmatprep.subr.mxu0 0.0
      %335 = vmatpush1.msra.mxu0 0.0
      %336 = vmatprep.subr.mxu0 0.0
      %337 = vmatpush1.msra.mxu0 0.0
      %338 = vmatprep.subr.mxu0 0.0
      %339 = vmatpush1.msra.mxu0 0.0
      %340 = vmatprep.subr.mxu0 0.0
      %341 = vmatpush1.msra.mxu0 0.0
      %342 = vmatprep.subr.mxu0 0.0
      %343 = vmatpush1.msra.mxu0 0.0
      %344 = vmatprep.subr.mxu0 0.0
      %345 = vmatpush1.msra.mxu0 0.0
      %346 = vmatprep.subr.mxu0 0.0
      %347 = vmatpush1.msra.mxu0 0.0
      %348 = vmatprep.subr.mxu0 0.0
      %349 = vmatpush1.msra.mxu0 0.0
      %350 = vmatprep.subr.mxu0 0.0
      %351 = vmatpush1.msra.mxu0 0.0
      %352 = vmatprep.subr.mxu0 0.0
      %353 = vmatpush1.msra.mxu0 0.0
      %354 = vmatprep.subr.mxu0 0.0
      %355 = vmatpush1.msra.mxu0 0.0
      %356 = vmatprep.subr.mxu0 0.0
      %357 = vmatpush1.msra.mxu0 0.0
      %358 = vmatprep.subr.mxu0 0.0
      %359 = vmatpush1.msra.mxu0 0.0
      %360 = vmatprep.subr.mxu0 0.0
      %361 = vmatpush1.msra.mxu0 0.0
      %362 = vmatprep.subr.mxu0 0.0
      %363 = vmatpush1.msra.mxu0 0.0
      %364 = vmatprep.subr.mxu0 0.0
      %365 = vmatpush1.msra.mxu0 0.0
      %366 = vmatprep.subr.mxu0 0.0
      %367 = vmatpush1.msra.mxu0 0.0
      %368 = vmatprep.subr.mxu0 0.0
      %369 = vmatpush1.msra.mxu0 0.0
      %370 = vmatprep.subr.mxu0 0.0
      %371 = vmatpush1.msra.mxu0 0.0
      %372 = vmatprep.subr.mxu0 0.0
      %373 = vmatpush1.msra.mxu0 0.0
      %374 = vmatprep.subr.mxu0 0.0
      %375 = vmatpush1.msra.mxu0 0.0
      %376 = vmatprep.subr.mxu0 0.0
      %377 = vmatpush1.msra.mxu0 0.0
      %378 = vmatprep.mubr.f32.mxu0 0.0
      %379 = vmatmul.mubr.f32.gmra.mrb[0].mxu0 %v312
      %v380 = vpop.f32.mrb[0].mxu0
      %v381 = vadd.f32 %v308, %v380
      %v382 = vpop.f32.mrb[0].mxu0
      %v383 = vadd.f32 %v308, %v382
      %384 = vdwg.mxu0
      %v387 = vcombine.low %v381, %v383
      %v389 = vunpack.c.l.s4 1983009808
      %v390 = vunpack.c.0.s8 %v389
      %v391 = vlaneseq
      %v392 = vshrl.u32 %v391, 7
      %v393 = vsub.s32 %v390, %v392
      %v394 = vrot.slane %v387, %v393
      %396 = vst [vmem:[%s285] sm:$0xf] %v394
      %vm397 = vcmask 1041408
      %v398 = vsel %vm397, %v381, inf
      %v399 = vsel %vm397, %v383, inf
      %v400 = vmin.f32 %v398, %v399
      %401 = vmin.xlane.f32.xlu0 %v400
      %v402 = vpop.xlane.xlu0 %401
      %v403 = vrot.slane %v402, 4
      %v404 = vmin.f32 %v402, %v403
      %v405 = vrot.slane %v404, 2
      %v406 = vmin.f32 %v404, %v405
      %v407 = vrot.slane %v406, 1
      %v408 = vmin.f32 %v406, %v407
      %s409 = vtos %v408
      %v410 = vsel %vm397, %v381, -inf
      %v411 = vsel %vm397, %v383, -inf
      %v412 = vmax.f32 %v410, %v411
      %413 = vmax.xlane.f32.xlu0 %v412
      %v414 = vpop.xlane.xlu0 %413
      %v415 = vrot.slane %v414, 4
      %v416 = vmax.f32 %v414, %v415
      %v417 = vrot.slane %v416, 2
      %v418 = vmax.f32 %v416, %v417
      %v419 = vrot.slane %v418, 1
      %v420 = vmax.f32 %v418, %v419
      %s421 = vtos %v420
      %v422 = vstv %s409
      %423 = vst [vmem:[%s293] sm:$0xff] %v422
      %v424 = vstv %s421
      %425 = vst [vmem:[%s300] sm:$0xff] %v424
      %s426 = smul.u32 2, %s22
      %p427 = scmp.lt.s32.totalorder %s21, 1
      %s428 = scalar_select %p427, %s21, 1
      %p429 = scmp.lt.s32.totalorder %s426, 1
      %s430 = scalar_select %p429, %s426, 1
      %s431 = smul.addr %s428, 2
      %s432 = sadd.s32 %s430, %s431
      %s433 = smul.addr %s432, 2
      %s434 = scalar_lea.vmem %s3, %s433
      %p435 = scmp.lt.s32.totalorder %s21, 1
      %s436 = scalar_select %p435, %s21, 1
      %p437 = scmp.lt.s32.totalorder %s22, 0
      %s438 = scalar_select %p437, %s22, 0
      %s439 = sadd.s32 %s438, %s436
      %s440 = smul.addr %s439, 8
      %s441 = scalar_lea.vmem %s4, %s440
      %p442 = scmp.lt.s32.totalorder %s21, 1
      %s443 = scalar_select %p442, %s21, 1
      %p444 = scmp.lt.s32.totalorder %s22, 0
      %s445 = scalar_select %p444, %s22, 0
      %s446 = sadd.s32 %s445, %s443
      %s447 = smul.addr %s446, 8
      %s448 = scalar_lea.vmem %s5, %s447
      // Predicated region
      $region33: #{autoencoder_forward.2} parent=31 // pred_check
        %p449 = pneg %p119
      $region34: #{autoencoder_forward.2} parent=31 // pred_check_branch
        %451 = sbr.rel (%p449) target = $region36
      $region35: #{autoencoder_forward.2} parent=31 // pred_region
        %s452 = smul.u32 2, %s22
      $region36: #{autoencoder_forward.2} parent=31 // pred_fallthru
        _
      // Predicated region
      $region37: #{autoencoder_forward.2} parent=31 // pred_check
        %p453 = pneg %p147
      $region38: #{autoencoder_forward.2} parent=31 // pred_check_branch
        %455 = sbr.rel (%p453) target = $region40
      $region39: #{autoencoder_forward.2} parent=31 // pred_region
        _
      $region40: #{autoencoder_forward.2} parent=31 // pred_fallthru
        _
      // Predicated region
      $region41: #{autoencoder_forward.2} parent=31 // pred_check
        %p456 = pneg %p175
      $region42: #{autoencoder_forward.2} parent=31 // pred_check_branch
        %458 = sbr.rel (%p456) target = $region44
      $region43: #{autoencoder_forward.2} parent=31 // pred_region
        _
      $region44: #{autoencoder_forward.2} parent=31 // pred_fallthru
        _
    $region32: #{autoencoder_forward.2} parent=5 // pred_fallthru
      _
    %p459 = scmp.le.s32.totalorder 2, %s12
    // Predicated region
    $region45: #{autoencoder_forward.2} parent=5 // pred_check
      %p460 = pneg %p459
    $region46: #{autoencoder_forward.2} parent=5 // pred_check_branch
      %462 = sbr.rel (%p460) target = $region48
    $region47: #{autoencoder_forward.2} parent=5 // pred_region
      %s463 = ssub.s32 %s12, 2
      // Predicated region
      $region49: #{autoencoder_forward.2} parent=47 // pred_check
        %p464 = pneg %p125
      $region50: #{autoencoder_forward.2} parent=47 // pred_check_branch
        %466 = sbr.rel (%p464) target = $region52
      $region51: #{autoencoder_forward.2} parent=47 // pred_region
        %s467 = smul.u32 2, %s24
        %p468 = scmp.lt.s32.totalorder %s23, 1
        %s469 = scalar_select %p468, %s23, 1
        %p470 = scmp.lt.s32.totalorder %s467, 1
        %s471 = scalar_select %p470, %s467, 1
        %s472 = smul.addr %s469, 2
        %s473 = sadd.s32 %s471, %s472
        %s474 = smul.addr %s473, 2
        %s475 = scalar_lea.vmem %s3, %s474
      $region52: #{autoencoder_forward.2} parent=47 // pred_fallthru
        _
      // Predicated region
      $region53: #{autoencoder_forward.2} parent=47 // pred_check
        %p476 = pneg %p153
      $region54: #{autoencoder_forward.2} parent=47 // pred_check_branch
        %478 = sbr.rel (%p476) target = $region56
      $region55: #{autoencoder_forward.2} parent=47 // pred_region
        %p479 = scmp.lt.s32.totalorder %s23, 1
        %s480 = scalar_select %p479, %s23, 1
        %p481 = scmp.lt.s32.totalorder %s24, 0
        %s482 = scalar_select %p481, %s24, 0
        %s483 = sadd.s32 %s482, %s480
        %s484 = smul.addr %s483, 8
        %s485 = scalar_lea.vmem %s4, %s484
      $region56: #{autoencoder_forward.2} parent=47 // pred_fallthru
        _
      // Predicated region
      $region57: #{autoencoder_forward.2} parent=47 // pred_check
        %p486 = pneg %p181
      $region58: #{autoencoder_forward.2} parent=47 // pred_check_branch
        %488 = sbr.rel (%p486) target = $region60
      $region59: #{autoencoder_forward.2} parent=47 // pred_region
        %p489 = scmp.lt.s32.totalorder %s23, 1
        %s490 = scalar_select %p489, %s23, 1
        %p491 = scmp.lt.s32.totalorder %s24, 0
        %s492 = scalar_select %p491, %s24, 0
        %s493 = sadd.s32 %s492, %s490
        %s494 = smul.addr %s493, 8
        %s495 = scalar_lea.vmem %s5, %s494
      $region60: #{autoencoder_forward.2} parent=47 // pred_fallthru
        _
    $region48: #{autoencoder_forward.2} parent=5 // pred_fallthru
      _
  $region6: #{autoencoder_forward.2} parent=0 // loop_footer
    %s16 = sadd.s32 1, %s12
  $region7: #{autoencoder_forward.2} parent=0 // loop_footer_branch
    %11 = sbr.rel target = $region3
  $region8: #{autoencoder_forward.2} parent=0 // loop_exit
    _

</llo_original>
